<compile_context>
chip_gen: v7x
topology: tpu7x:2x2x1
jax: 0.10.0
libtpu: 0.0.40
codegen_flags: <defaults>
</compile_context>

<pallas_src>
import functools

import jax
import jax.numpy as jnp
from jax.experimental import pallas as pl
from jax.experimental.pallas import tpu as pltpu

_LANE = 128
_SUBLANE = 8
_MAX_TILE_LANES = 256 * 1024  # beyond this, per-step overhead is fully amortized


def _round_up(x, m):
    return ((x + m - 1) // m) * m


def _physical_vmem_bytes():
    """Physical VMEM of the attached TPU (128 MiB v5e/v6e, 64 MiB v7x)."""
    try:
        info = pltpu.get_tpu_info()
        v = int(getattr(info, "vmem_capacity_bytes", 0) or 0)
        if v > 0:
            return v
    except Exception:
        pass
    try:
        kind = jax.devices()[0].device_kind.lower()
    except Exception:
        kind = ""
    if "v5" in kind or "v6" in kind:
        return 128 << 20
    return 64 << 20  # v7x and conservative default


def _pick_tiling(n, c_in, c_out, s, itemsize, tile_s=None):
    """Pick the spatial tile (lanes) and an explicit VMEM limit.

    Double-buffered per-step working set:
        ~= 2 * (roundup(c_in, 8) + roundup(c_out, 8)) * ts * itemsize
    (weights/bias are negligible).  Budget it against this chip's VMEM so the
    kernel runs HBM-bandwidth-bound instead of per-step-overhead-bound.
    """
    s_pad128 = _round_up(s, _LANE)
    phys = _physical_vmem_bytes()
    vmem_limit = min(phys // 2, 64 << 20)   # 32 MiB on v7x, 64 MiB on v5e/v6e
    tile_budget = (vmem_limit * 3) // 4     # headroom for params / compiler scratch

    rows = _round_up(c_in, _SUBLANE) + _round_up(c_out, _SUBLANE)
    ts_budget = tile_budget // (2 * rows * itemsize)

    ts = ts_budget if tile_s is None else min(int(tile_s), ts_budget)
    ts = min(ts, _MAX_TILE_LANES, s_pad128)

    # Keep >= ~8 total grid steps (ceil(8/n) spatial tiles) so DMA/compute
    # overlap survives and both v7x TensorCores get sharded work when n is small.
    min_spatial_tiles = -(-8 // max(n, 1))
    ts = min(ts, max(_LANE, s_pad128 // min_spatial_tiles))

    ts = max(_LANE, (ts // _LANE) * _LANE)
    return ts, vmem_limit


def _outconv_kernel(x_ref, w_ref, b_ref, o_ref):
    # x_ref: (1, C_in, TS), w_ref: (C_out, C_in), b_ref: (C_out, 1)
    # o_ref: (1, C_out, TS)
    acc = jnp.dot(w_ref[...], x_ref[0], preferred_element_type=jnp.float32)
    o_ref[0] = (acc + b_ref[...]).astype(o_ref.dtype)


@functools.partial(jax.jit, static_argnames=("ts", "vmem_limit"))
def _outconv_call(x, weight, bias, ts, vmem_limit):
    n, c_in, d, h, w = x.shape
    c_out = weight.shape[0]
    s = d * h * w

    # Free (contiguous) reshapes: no transpose, no data movement.
    x3d = x.reshape(n, c_in, s)
    w2d = weight.reshape(c_out, c_in)
    b2d = bias.reshape(c_out, 1).astype(jnp.float32)

    grid = (n, pl.cdiv(s, ts))  # ragged last spatial block is masked by Pallas

    itemsize = x.dtype.itemsize
    cost = pl.CostEstimate(
        flops=2 * n * c_out * c_in * s,
        transcendentals=0,
        bytes_accessed=(n * c_in * s + n * c_out * s) * itemsize
        + (c_out * c_in + c_out) * 4,
    )

    out3d = pl.pallas_call(
        _outconv_kernel,
        out_shape=jax.ShapeDtypeStruct((n, c_out, s), x.dtype),
        grid_spec=pltpu.PrefetchScalarGridSpec(
            num_scalar_prefetch=0,
            grid=grid,
            in_specs=[
                # Input block: full channel axis on sublanes, spatial on lanes.
                pl.BlockSpec((1, c_in, ts), lambda ni, si: (ni, 0, si)),
                # Weight and bias stay VMEM-resident (constant index_map).
                pl.BlockSpec((c_out, c_in), lambda ni, si: (0, 0)),
                pl.BlockSpec((c_out, 1), lambda ni, si: (0, 0)),
            ],
            out_specs=pl.BlockSpec((1, c_out, ts), lambda ni, si: (ni, 0, si)),
        ),
        compiler_params=pltpu.CompilerParams(
            dimension_semantics=("parallel", "parallel"),
            vmem_limit_bytes=vmem_limit,
        ),
        cost_estimate=cost,
    )(x3d, w2d, b2d)

    return out3d.reshape(n, c_out, d, h, w)


def outconv_forward(x, weight, bias, tile_s=None):
    """1x1x1 Conv3d forward (OutConv).

    x:      (N, C_in, D, H, W)
    weight: (C_out, C_in, 1, 1, 1)
    bias:   (C_out,)
    tile_s: optional upper bound on the spatial tile (lanes); default = auto
            VMEM-budgeted per chip generation.
    returns (N, C_out, D, H, W)
    """
    n, c_in, d, h, w = x.shape
    c_out = weight.shape[0]
    s = d * h * w
    ts, vmem_limit = _pick_tiling(n, c_in, c_out, s, x.dtype.itemsize, tile_s)
    return _outconv_call(x, weight, bias, ts, vmem_limit)


if __name__ == "__main__":
    key = jax.random.PRNGKey(0)
    k_x, k_w, k_b = jax.random.split(key, 3)

    # Small UNet-head-like shapes.  D*H*W = 3*9*11 = 297 is deliberately NOT a
    # multiple of 128 so the ragged-last-tile masking path is exercised.
    N, C_IN, C_OUT, D, H, W = 2, 4, 3, 3, 9, 11

    x = jax.random.normal(k_x, (N, C_IN, D, H, W), dtype=jnp.float32)
    weight = jax.random.normal(k_w, (C_OUT, C_IN, 1, 1, 1), dtype=jnp.float32) * 0.1
    bias = jax.random.normal(k_b, (C_OUT,), dtype=jnp.float32) * 0.1

    out = jax.block_until_ready(outconv_forward(x, weight, bias))

    # Reference: per-voxel channel matmul (exactly what a 1x1x1 conv does).
    ref = jnp.einsum("ncdhw,oc->nodhw", x, weight.reshape(C_OUT, C_IN)) + bias.reshape(
        1, C_OUT, 1, 1, 1
    )
    assert out.shape == (N, C_OUT, D, H, W)
    assert jnp.allclose(out, ref, atol=1e-5, rtol=1e-5)

    print("KERNEL_OK")
</pallas_src>

<mosaic_0001>
module attributes {stable_mosaic.version = 11 : i64} {
  func.func @_outconv_kernel(%arg0: i32, %arg1: i32, %arg2: memref<1x4x128xf32, #tpu.memory_space<vmem>>, %arg3: memref<3x4xf32, #tpu.memory_space<vmem>>, %arg4: memref<3x1xf32, #tpu.memory_space<vmem>>, %arg5: memref<1x3x128xf32, #tpu.memory_space<vmem>>) attributes {dimension_semantics = [#tpu.dimension_semantics<parallel>, #tpu.dimension_semantics<parallel>], iteration_bounds = array<i64: 2, 3>, scalar_prefetch = 0 : i64, scratch_operands = 0 : i64, tpu.core_type = #tpu.core_type<tc>, window_params = [{transform_indices = @transform_0, window_bounds = array<i64: 1, 4, 128>}, {pipeline_mode = #tpu.pipeline_mode<synchronous>, transform_indices = @transform_1, window_bounds = array<i64: 3, 4>}, {pipeline_mode = #tpu.pipeline_mode<synchronous>, transform_indices = @transform_2, window_bounds = array<i64: 3, 1>}, {transform_indices = @transform_3, window_bounds = array<i64: 1, 3, 128>}]} {
    %c0 = arith.constant 0 : index
    %c0_0 = arith.constant 0 : index
    %0 = vector.load %arg3[%c0, %c0_0] : memref<3x4xf32, #tpu.memory_space<vmem>>, vector<3x4xf32>
    %c0_1 = arith.constant 0 : index
    %c0_2 = arith.constant 0 : index
    %c0_3 = arith.constant 0 : index
    %1 = vector.load %arg2[%c0_1, %c0_2, %c0_3] : memref<1x4x128xf32, #tpu.memory_space<vmem>>, vector<1x4x128xf32>
    %2 = vector.shape_cast %1 : vector<1x4x128xf32> to vector<4x128xf32>
    %cst = arith.constant dense<0.000000e+00> : vector<3x128xf32>
    %3 = tpu.matmul %0, %2, %cst {dimension_numbers = #tpu.dot_dimension_numbers<[1], [0], [0], [1], [0, 0, 1, 1], [], []>} : vector<3x4xf32>, vector<4x128xf32>, vector<3x128xf32> -> vector<3x128xf32>
    %c0_4 = arith.constant 0 : index
    %c0_5 = arith.constant 0 : index
    %4 = vector.load %arg4[%c0_4, %c0_5] : memref<3x1xf32, #tpu.memory_space<vmem>>, vector<3x1xf32>
    %5 = vector.broadcast %4 : vector<3x1xf32> to vector<3x128xf32>
    %6 = arith.addf %3, %5 : vector<3x128xf32>
    %c0_6 = arith.constant 0 : index
    %c0_7 = arith.constant 0 : index
    %c0_8 = arith.constant 0 : index
    %7 = vector.load %arg5[%c0_6, %c0_7, %c0_8] : memref<1x3x128xf32, #tpu.memory_space<vmem>>, vector<1x3x128xf32>
    %8 = vector.shape_cast %7 : vector<1x3x128xf32> to vector<3x128xf32>
    %9 = vector.shape_cast %6 : vector<3x128xf32> to vector<1x3x128xf32>
    tpu.vector_store %arg5[%c0_6, %c0_7, %c0_8], %9 {strides = array<i32>} : memref<1x3x128xf32, #tpu.memory_space<vmem>>, vector<1x3x128xf32>,
    return
  }
  func.func @transform_0(%arg0: i32, %arg1: i32) -> (i32, i32, i32) {
    %c0_i32 = arith.constant 0 : i32
    %c0_i32_0 = arith.constant 0 : i32
    return %arg0, %c0_i32, %arg1 : i32, i32, i32
  }
  func.func @transform_1(%arg0: i32, %arg1: i32) -> (i32, i32) {
    %c0_i32 = arith.constant 0 : i32
    %c0_i32_0 = arith.constant 0 : i32
    %c0_i32_1 = arith.constant 0 : i32
    return %c0_i32, %c0_i32_0 : i32, i32
  }
  func.func @transform_2(%arg0: i32, %arg1: i32) -> (i32, i32) {
    %c0_i32 = arith.constant 0 : i32
    %c0_i32_0 = arith.constant 0 : i32
    %c0_i32_1 = arith.constant 0 : i32
    return %c0_i32, %c0_i32_0 : i32, i32
  }
  func.func @transform_3(%arg0: i32, %arg1: i32) -> (i32, i32, i32) {
    %c0_i32 = arith.constant 0 : i32
    %c0_i32_0 = arith.constant 0 : i32
    return %arg0, %c0_i32, %arg1 : i32, i32, i32
  }
}

</mosaic_0001>

<llo_original>
// kernel: _outconv_call.1
$region0: #{_outconv_call.1}
  #allocation0 [shape = 'u32[]', space=smem, size = 0x4, offset = 0x4, fixed_abs, tag = 'smem constant byte address 0x4 - core index']
  #allocation1 [shape = 'u32[144,128]{1,0:T(1,128)}', space=vmem, size = 0x12000, scoped, tag = 'internal scratch']
  %s0 = inlined_call_operand.vmem [shape: f32[2,4,297], index: 0, kind: input, shape index: {}]
  %s1 = inlined_call_operand.vmem [shape: f32[3,4], index: 1, kind: input, shape index: {}]
  %s2 = inlined_call_operand.vmem [shape: f32[3,1], index: 2, kind: input, shape index: {}]
  %s3 = inlined_call_operand.vmem [shape: f32[2,3,297], index: 3, kind: output, shape index: {}]
  %s4 = sld [smem:[#allocation0]]
  $region45: #{_outconv_call.1} parent=0
    _
  %s6 = ssub.s32 1, %s4
  %s7 = scalar_select 0, %s6, %s4
  loop: start=0, step=1, limit=8
  $region2: #{_outconv_call.1} parent=0 // loop_pre_header
    _
  $region3: #{_outconv_call.1} parent=0 // loop_header
    %s9 = sphi 0, %s13
    %p10 = scmp.ge.s32.totalorder %s9, 8
    %s16 = sphi 0, %s28
    %s17 = sphi 0, %s24
    %s18 = sphi 0, %s16
    %s19 = sphi 0, %s17
    %s20 = sphi 0, %s18
    %s21 = sphi 0, %s19
    %s33 = sphi 0, %s35
    %s36 = sphi 0, %s33
    %s37 = sphi 0, %s36
    %s53 = sphi 0, %s37
    %s57 = sphi 0, %s57
    %s59 = sphi 0, %s57
    %s60 = sphi 0, %s59
    %s74 = sphi 0, %s60
    %s78 = sphi 0, %s78
    %s80 = sphi 0, %s78
    %s81 = sphi 0, %s80
    %s95 = sphi 0, %s81
    %s103 = sphi 0, %s105
    %s106 = sphi 0, %s103
    %s107 = sphi 0, %s106
    %s123 = sphi 0, %s107
  $region4: #{_outconv_call.1} parent=0 // loop_header_branch
    %12 = sbr.rel (%p10) target = $region8
  $region5: #{_outconv_call.1} parent=0 // loop_body
    %s14 = ssub.s32 %s9, 1
    %s15 = ssub.s32 %s9, 2
    %s22 = sadd.s32 1, %s17
    %p23 = scmp.ge.s32.totalorder %s22, 3
    %s24 = scalar_select %p23, 0, %s22
    %s25 = sadd.s32 1, %s16
    %s26 = scalar_select %p23, %s25, %s16
    %p27 = scmp.ge.s32.totalorder %s26, 2
    %s28 = scalar_select %p27, 0, %s26
    %s29 = ssub.s32 %s16, %s28
    %s30 = ssub.s32 %s17, %s24
    %s31 = sor.u32 %s29, %s30
    %p32 = scmp.eq.s32.totalorder %s31, 0
    %s34 = sadd.s32 %s33, 1
    %s35 = scalar_select %p32, %s33, %s34
    %p38 = pneg %p32
    %p39 = scmp.eq.s32.totalorder %s9, 5
    %p40 = por %p38, %p39
    %p41 = scmp.ne.s32.totalorder %s33, %s36
    %p42 = scmp.eq.s32.totalorder %s9, 0
    %p43 = por %p41, %p42
    %p44 = scmp.ne.s32.totalorder %s33, %s36
    %p45 = scmp.eq.s32.totalorder %s14, 5
    %p46 = por %p44, %p45
    %p47 = scmp.ne.s32.totalorder %s36, %s37
    %p48 = scmp.eq.s32.totalorder %s14, 0
    %p49 = por %p47, %p48
    %p50 = scmp.ne.s32.totalorder %s36, %s37
    %p51 = scmp.eq.s32.totalorder %s15, 5
    %p52 = por %p50, %p51
    %p54 = scmp.ne.s32.totalorder %s37, %s53
    %p55 = scmp.eq.s32.totalorder %s15, 0
    %p56 = por %p54, %p55
    %s58 = sadd.s32 %s57, 1
    %p61 = scmp.eq.s32.totalorder %s9, 5
    %p62 = scmp.ne.s32.totalorder %s57, %s59
    %p63 = scmp.eq.s32.totalorder %s9, 0
    %p64 = por %p62, %p63
    %p65 = scmp.ne.s32.totalorder %s57, %s59
    %p66 = scmp.eq.s32.totalorder %s14, 5
    %p67 = por %p65, %p66
    %p68 = scmp.ne.s32.totalorder %s59, %s60
    %p69 = scmp.eq.s32.totalorder %s14, 0
    %p70 = por %p68, %p69
    %p71 = scmp.ne.s32.totalorder %s59, %s60
    %p72 = scmp.eq.s32.totalorder %s15, 5
    %p73 = por %p71, %p72
    %p75 = scmp.ne.s32.totalorder %s60, %s74
    %p76 = scmp.eq.s32.totalorder %s15, 0
    %p77 = por %p75, %p76
    %s79 = sadd.s32 %s78, 1
    %p82 = scmp.eq.s32.totalorder %s9, 5
    %p83 = scmp.ne.s32.totalorder %s78, %s80
    %p84 = scmp.eq.s32.totalorder %s9, 0
    %p85 = por %p83, %p84
    %p86 = scmp.ne.s32.totalorder %s78, %s80
    %p87 = scmp.eq.s32.totalorder %s14, 5
    %p88 = por %p86, %p87
    %p89 = scmp.ne.s32.totalorder %s80, %s81
    %p90 = scmp.eq.s32.totalorder %s14, 0
    %p91 = por %p89, %p90
    %p92 = scmp.ne.s32.totalorder %s80, %s81
    %p93 = scmp.eq.s32.totalorder %s15, 5
    %p94 = por %p92, %p93
    %p96 = scmp.ne.s32.totalorder %s81, %s95
    %p97 = scmp.eq.s32.totalorder %s15, 0
    %p98 = por %p96, %p97
    %s99 = ssub.s32 %s16, %s28
    %s100 = ssub.s32 %s17, %s24
    %s101 = sor.u32 %s99, %s100
    %p102 = scmp.eq.s32.totalorder %s101, 0
    %s104 = sadd.s32 %s103, 1
    %s105 = scalar_select %p102, %s103, %s104
    %p108 = pneg %p102
    %p109 = scmp.eq.s32.totalorder %s9, 5
    %p110 = por %p108, %p109
    %p111 = scmp.ne.s32.totalorder %s103, %s106
    %p112 = scmp.eq.s32.totalorder %s9, 0
    %p113 = por %p111, %p112
    %p114 = scmp.ne.s32.totalorder %s103, %s106
    %p115 = scmp.eq.s32.totalorder %s14, 5
    %p116 = por %p114, %p115
    %p117 = scmp.ne.s32.totalorder %s106, %s107
    %p118 = scmp.eq.s32.totalorder %s14, 0
    %p119 = por %p117, %p118
    %p120 = scmp.ne.s32.totalorder %s106, %s107
    %p121 = scmp.eq.s32.totalorder %s15, 5
    %p122 = por %p120, %p121
    %p124 = scmp.ne.s32.totalorder %s107, %s123
    %p125 = scmp.eq.s32.totalorder %s15, 0
    %p126 = por %p124, %p125
    %p127 = scmp.le.s32.totalorder 1, %s9
    %p128 = scmp.lt.s32.totalorder %s9, 7
    %p129 = pnand %p127, %p128
    %p130 = pneg %p129
    // Predicated region
    $region9: #{_outconv_call.1} parent=5 // pred_check
      _
    $region10: #{_outconv_call.1} parent=5 // pred_check_branch
      %132 = sbr.rel (%p129) target = $region12
    $region11: #{_outconv_call.1} parent=5 // pred_region
      %s133 = ssub.s32 %s9, 1
      // Predicated region
      $region13: #{_outconv_call.1} parent=11 // pred_check
        %p134 = pneg %p70
      $region14: #{_outconv_call.1} parent=11 // pred_check_branch
        %136 = sbr.rel (%p134) target = $region16
      $region15: #{_outconv_call.1} parent=11 // pred_region
        _
      $region16: #{_outconv_call.1} parent=11 // pred_fallthru
        _
      // Predicated region
      $region17: #{_outconv_call.1} parent=11 // pred_check
        %p137 = pneg %p91
      $region18: #{_outconv_call.1} parent=11 // pred_check_branch
        %139 = sbr.rel (%p137) target = $region20
      $region19: #{_outconv_call.1} parent=11 // pred_region
        _
      $region20: #{_outconv_call.1} parent=11 // pred_fallthru
        _
    $region12: #{_outconv_call.1} parent=5 // pred_fallthru
      _
    %p140 = scmp.lt.s32.totalorder %s9, 6
    // Predicated region
    $region21: #{_outconv_call.1} parent=5 // pred_check
      %p141 = pneg %p140
    $region22: #{_outconv_call.1} parent=5 // pred_check_branch
      %143 = sbr.rel (%p141) target = $region24
    $region23: #{_outconv_call.1} parent=5 // pred_region
      // Predicated region
      $region25: #{_outconv_call.1} parent=23 // pred_check
        %p144 = pneg %p43
      $region26: #{_outconv_call.1} parent=23 // pred_check_branch
        %146 = sbr.rel (%p144) target = $region28
      $region27: #{_outconv_call.1} parent=23 // pred_region
        %p147 = scmp.lt.s32.totalorder %s16, 1
        %s148 = scalar_select %p147, %s16, 1
        %p149 = scmp.lt.s32.totalorder %s17, 2
        %s150 = scalar_select %p149, %s17, 2
        %s151 = smul.addr %s148, 3
        %s152 = sadd.s32 %s150, %s151
        %s153 = smul.addr %s152, 4
        %s154 = scalar_lea.vmem %s0, %s153
      $region28: #{_outconv_call.1} parent=23 // pred_fallthru
        _
    $region24: #{_outconv_call.1} parent=5 // pred_fallthru
      _
    %p155 = scmp.le.s32.totalorder 1, %s9
    %p156 = scmp.lt.s32.totalorder %s9, 7
    %p157 = pnand %p155, %p156
    %p158 = pneg %p157
    // Predicated region
    $region29: #{_outconv_call.1} parent=5 // pred_check
      _
    $region30: #{_outconv_call.1} parent=5 // pred_check_branch
      %160 = sbr.rel (%p157) target = $region32
    $region31: #{_outconv_call.1} parent=5 // pred_region
      %s161 = ssub.s32 %s9, 1
      %p162 = scmp.lt.s32.totalorder %s18, 1
      %s163 = scalar_select %p162, %s18, 1
      %p164 = scmp.lt.s32.totalorder %s19, 2
      %s165 = scalar_select %p164, %s19, 2
      %s166 = smul.addr %s163, 3
      %s167 = sadd.s32 %s165, %s166
      %s168 = smul.addr %s167, 4
      %s169 = scalar_lea.vmem %s0, %s168
      %p170 = pneg %p49
      %p171 = pneg %p46
      %p172 = pneg %p70
      %p173 = pneg %p67
      %p174 = pneg %p91
      %p175 = pneg %p88
      %p176 = pneg %p119
      %p177 = pneg %p116
      %p178 = scmp.lt.s32.totalorder %s18, 1
      %s179 = scalar_select %p178, %s18, 1
      %p180 = scmp.lt.s32.totalorder %s19, 2
      %s181 = scalar_select %p180, %s19, 2
      %s182 = smul.addr %s179, 3
      %s183 = sadd.s32 %s181, %s182
      %s184 = smul.addr %s183, 4
      %s185 = scalar_lea.vmem %s3, %s184
      %p186 = scmp.lt.s32.totalorder %s18, 1
      %s187 = scalar_select %p186, %s18, 1
      %p188 = scmp.lt.s32.totalorder %s19, 2
      %s189 = scalar_select %p188, %s19, 2
      %s190 = smul.addr %s187, 3
      %s191 = sadd.s32 %s189, %s190
      %s192 = smul.addr %s191, 4
      %s193 = scalar_lea.vmem %s0, %s192
      %p194 = scmp.lt.s32.totalorder %s18, 1
      %s195 = scalar_select %p194, %s18, 1
      %p196 = scmp.lt.s32.totalorder %s19, 2
      %s197 = scalar_select %p196, %s19, 2
      %s198 = smul.addr %s195, 3
      %s199 = sadd.s32 %s197, %s198
      %s200 = smul.addr %s199, 4
      %s201 = scalar_lea.vmem %s3, %s200
      %v202 = vld [vmem:[%s1] sm:$0x7]
      %v203 = vld [vmem:[%s193] sm:$0xf]
      %v204 = vld [vmem:[%s2] sm:$0x7]
      %206 = vset.pattern.permute.xlu0 0
      %207 = vperm.xlu0 %206, %v204
      %v208 = vpop.permute.xlu0 %207
      %vm210 = vcmask 31744
      %v212 = vsel %vm210, %v202, 0
      %vm214 = vcmask 1043456
      %v216 = vsel %vm214, %v203, 0
      %218 = vmatprep.subr.mxu0 0.0
      %219 = vmatpush1.msra.mxu0 %v216
      %220 = vmatprep.subr.mxu0 0.0
      %221 = vmatpush1.msra.mxu0 0.0
      %222 = vmatprep.subr.mxu0 0.0
      %223 = vmatpush1.msra.mxu0 0.0
      %224 = vmatprep.subr.mxu0 0.0
      %225 = vmatpush1.msra.mxu0 0.0
      %226 = vmatprep.subr.mxu0 0.0
      %227 = vmatpush1.msra.mxu0 0.0
      %228 = vmatprep.subr.mxu0 0.0
      %229 = vmatpush1.msra.mxu0 0.0
      %230 = vmatprep.subr.mxu0 0.0
      %231 = vmatpush1.msra.mxu0 0.0
      %232 = vmatprep.subr.mxu0 0.0
      %233 = vmatpush1.msra.mxu0 0.0
      %234 = vmatprep.subr.mxu0 0.0
      %235 = vmatpush1.msra.mxu0 0.0
      %236 = vmatprep.subr.mxu0 0.0
      %237 = vmatpush1.msra.mxu0 0.0
      %238 = vmatprep.subr.mxu0 0.0
      %239 = vmatpush1.msra.mxu0 0.0
      %240 = vmatprep.subr.mxu0 0.0
      %241 = vmatpush1.msra.mxu0 0.0
      %242 = vmatprep.subr.mxu0 0.0
      %243 = vmatpush1.msra.mxu0 0.0
      %244 = vmatprep.subr.mxu0 0.0
      %245 = vmatpush1.msra.mxu0 0.0
      %246 = vmatprep.subr.mxu0 0.0
      %247 = vmatpush1.msra.mxu0 0.0
      %248 = vmatprep.subr.mxu0 0.0
      %249 = vmatpush1.msra.mxu0 0.0
      %250 = vmatprep.subr.mxu0 0.0
      %251 = vmatpush1.msra.mxu0 0.0
      %252 = vmatprep.subr.mxu0 0.0
      %253 = vmatpush1.msra.mxu0 0.0
      %254 = vmatprep.subr.mxu0 0.0
      %255 = vmatpush1.msra.mxu0 0.0
      %256 = vmatprep.subr.mxu0 0.0
      %257 = vmatpush1.msra.mxu0 0.0
      %258 = vmatprep.subr.mxu0 0.0
      %259 = vmatpush1.msra.mxu0 0.0
      %260 = vmatprep.subr.mxu0 0.0
      %261 = vmatpush1.msra.mxu0 0.0
      %262 = vmatprep.subr.mxu0 0.0
      %263 = vmatpush1.msra.mxu0 0.0
      %264 = vmatprep.subr.mxu0 0.0
      %265 = vmatpush1.msra.mxu0 0.0
      %266 = vmatprep.subr.mxu0 0.0
      %267 = vmatpush1.msra.mxu0 0.0
      %268 = vmatprep.subr.mxu0 0.0
      %269 = vmatpush1.msra.mxu0 0.0
      %270 = vmatprep.subr.mxu0 0.0
      %271 = vmatpush1.msra.mxu0 0.0
      %272 = vmatprep.subr.mxu0 0.0
      %273 = vmatpush1.msra.mxu0 0.0
      %274 = vmatprep.subr.mxu0 0.0
      %275 = vmatpush1.msra.mxu0 0.0
      %276 = vmatprep.subr.mxu0 0.0
      %277 = vmatpush1.msra.mxu0 0.0
      %278 = vmatprep.subr.mxu0 0.0
      %279 = vmatpush1.msra.mxu0 0.0
      %280 = vmatprep.subr.mxu0 0.0
      %281 = vmatpush1.msra.mxu0 0.0
      %282 = vmatprep.mubr.f32.mxu0 0.0
      %283 = vmatmul.mubr.f32.gmra.mrb[0].mxu0 %v212
      %v284 = vpop.f32.mrb[0].mxu0
      %v285 = vadd.f32 %v208, %v284
      %v286 = vpop.f32.mrb[0].mxu0
      %287 = vdwg.mxu0
      %288 = vst [vmem:[%s201] sm:$0x7] %v285
      %p289 = scmp.lt.s32.totalorder %s18, 1
      %s290 = scalar_select %p289, %s18, 1
      %p291 = scmp.lt.s32.totalorder %s19, 2
      %s292 = scalar_select %p291, %s19, 2
      %s293 = smul.addr %s290, 3
      %s294 = sadd.s32 %s292, %s293
      %s295 = smul.addr %s294, 4
      %s296 = scalar_lea.vmem %s3, %s295
      // Predicated region
      $region33: #{_outconv_call.1} parent=31 // pred_check
        %p297 = pneg %p116
      $region34: #{_outconv_call.1} parent=31 // pred_check_branch
        %299 = sbr.rel (%p297) target = $region36
      $region35: #{_outconv_call.1} parent=31 // pred_region
        _
      $region36: #{_outconv_call.1} parent=31 // pred_fallthru
        _
    $region32: #{_outconv_call.1} parent=5 // pred_fallthru
      _
    %p300 = scmp.le.s32.totalorder 2, %s9
    // Predicated region
    $region37: #{_outconv_call.1} parent=5 // pred_check
      %p301 = pneg %p300
    $region38: #{_outconv_call.1} parent=5 // pred_check_branch
      %303 = sbr.rel (%p301) target = $region40
    $region39: #{_outconv_call.1} parent=5 // pred_region
      %s304 = ssub.s32 %s9, 2
      // Predicated region
      $region41: #{_outconv_call.1} parent=39 // pred_check
        %p305 = pneg %p122
      $region42: #{_outconv_call.1} parent=39 // pred_check_branch
        %307 = sbr.rel (%p305) target = $region44
      $region43: #{_outconv_call.1} parent=39 // pred_region
        %p308 = scmp.lt.s32.totalorder %s20, 1
        %s309 = scalar_select %p308, %s20, 1
        %p310 = scmp.lt.s32.totalorder %s21, 2
        %s311 = scalar_select %p310, %s21, 2
        %s312 = smul.addr %s309, 3
        %s313 = sadd.s32 %s311, %s312
        %s314 = smul.addr %s313, 4
        %s315 = scalar_lea.vmem %s3, %s314
      $region44: #{_outconv_call.1} parent=39 // pred_fallthru
        _
    $region40: #{_outconv_call.1} parent=5 // pred_fallthru
      _
  $region6: #{_outconv_call.1} parent=0 // loop_footer
    %s13 = sadd.s32 1, %s9
  $region7: #{_outconv_call.1} parent=0 // loop_footer_branch
    %8 = sbr.rel target = $region3
  $region8: #{_outconv_call.1} parent=0 // loop_exit
    _

</llo_original>
